<compile_context>
chip_gen: v7x
topology: tpu7x:2x2x1
jax: 0.10.0
libtpu: 0.0.40
codegen_flags: <defaults>
</compile_context>

<pallas_src>
import functools

import jax
import jax.numpy as jnp
import numpy as np
from jax.experimental import pallas as pl
from jax.experimental.pallas import tpu as pltpu


def _fused_reg_loss_kernel(ind_ref, vc_ref, feat_ref, tgt_ref, out_ref, acc_ref,
                           *, num_slots, loss_type):
    """Grid axis 0 iterates over candidate offsets (last slot = base fallback).

    ind_ref : SMEM (num_slots * B,) i32  flattened per-offset gather indices
    vc_ref  : SMEM (num_slots + 1,) i32  [valid(0..N-1), count_of_valid]
    feat_ref: VMEM (B, C, WH)            resident across all grid steps
    tgt_ref : VMEM (B, C)                this offset's target boxes
    out_ref : VMEM (1, 1) f32            final loss (written at last step)
    acc_ref : VMEM (1, 1) f32 scratch    masked running sum of offset losses
    """
    n = pl.program_id(0)
    B, C, WH = feat_ref.shape

    @pl.when(n == 0)
    def _():
        acc_ref[...] = jnp.zeros_like(acc_ref)

    # ---- gather: pred[b, c] = feat[b, c, ind[n, b]] (indices from SMEM) -----
    lane = jax.lax.broadcasted_iota(jnp.int32, (B, WH), 1)
    row = jax.lax.broadcasted_iota(jnp.int32, (B, WH), 0)
    sel = jnp.zeros((B, WH), jnp.bool_)
    for b in range(B):                       # B is small and static
        sel = sel | ((row == b) & (lane == ind_ref[n * B + b]))
    feat = feat_ref[...]
    pred = jnp.sum(jnp.where(sel[:, None, :], feat, jnp.zeros((), feat.dtype)),
                   axis=-1).astype(jnp.float32)              # (B, C)
    tgt = tgt_ref[...].astype(jnp.float32)                   # (B, C)

    # ---- per-offset loss (mean over batch) ----------------------------------
    if loss_type == "iou":
        p_l, p_r = pred[:, 0:1], pred[:, 1:2]
        p_t, p_b = pred[:, 2:3], pred[:, 3:4]
        t_l, t_r = tgt[:, 0:1], tgt[:, 1:2]
        t_t, t_b = tgt[:, 2:3], tgt[:, 3:4]
        target_area = (t_l + t_r) * (t_t + t_b)
        pred_area = (p_l + p_r) * (p_t + p_b)
        w_intersect = jnp.minimum(p_l, t_l) + jnp.minimum(p_r, t_r)
        h_intersect = jnp.minimum(p_b, t_b) + jnp.minimum(p_t, t_t)
        area_i = w_intersect * h_intersect
        area_u = target_area + pred_area - area_i
        loss_blk = jnp.mean(-jnp.log((area_i + 1.0) / (area_u + 1.0)),
                            keepdims=True)                   # (1, 1)
    else:  # 'l2' -> nn.MSELoss(reduction='mean')
        loss_blk = jnp.mean((pred - tgt) ** 2, keepdims=True)  # (1, 1)

    # Masked accumulation (jnp.where so an invalid slot's NaN cannot leak).
    valid = vc_ref[n] > 0
    contrib = jnp.where(valid, loss_blk, jnp.zeros_like(loss_blk))
    acc_new = acc_ref[...] + contrib
    acc_ref[...] = acc_new

    @pl.when(n == num_slots - 1)
    def _():
        count = vc_ref[num_slots]
        mean_blk = acc_new / jnp.maximum(count.astype(jnp.float32), 1.0)
        # If no offset survived the checks, fall back to the last slot's loss,
        # which the wrapper fills with the unshifted (ind, target).
        out_ref[...] = jnp.where(count > 0, mean_blk, loss_blk)


def _fused_reg_loss(feat, inds, targets, valid, loss_type):
    """feat: (B, C, WH); inds: (N, B) i32; targets: (N, B, C); valid: (N,) i32."""
    B, C, WH = feat.shape
    N = inds.shape[0]
    count = jnp.sum(valid).astype(jnp.int32)
    vc = jnp.concatenate([valid.astype(jnp.int32), count[None]])   # (N + 1,)
    ind_flat = inds.reshape(-1).astype(jnp.int32)                  # (N * B,)

    kernel = functools.partial(_fused_reg_loss_kernel,
                               num_slots=N, loss_type=loss_type)
    out = pl.pallas_call(
        kernel,
        out_shape=jax.ShapeDtypeStruct((1, 1), jnp.float32),
        grid_spec=pltpu.PrefetchScalarGridSpec(
            num_scalar_prefetch=2,
            grid=(N,),
            in_specs=[
                # feat: constant index_map -> DMA'd once, resident in VMEM.
                pl.BlockSpec((B, C, WH), lambda n, *_: (0, 0, 0)),
                # per-offset target block (leading offset dim squeezed).
                pl.BlockSpec((None, B, C), lambda n, *_: (n, 0, 0)),
            ],
            out_specs=pl.BlockSpec((1, 1), lambda n, *_: (0, 0)),
            scratch_shapes=[pltpu.VMEM((1, 1), jnp.float32)],
        ),
        # The single grid axis carries the loss accumulator -> "arbitrary".
        # (On v7x a batch axis could be added as "parallel" for the 2nd TC.)
        compiler_params=pltpu.CompilerParams(dimension_semantics=("arbitrary",)),
    )(ind_flat, vc, feat, targets.astype(jnp.float32))
    return out[0, 0]


def reg_loss(output, ind, target, radius=None, stride=None, dim=4, loss_type="iou"):
    """Mirrors REGLoss.forward. Jit-compatible (radius/stride/dim/loss_type static)."""
    assert loss_type in ("iou", "l2")
    width, height = output.shape[-2], output.shape[-1]
    output = output.reshape(-1, dim, width, height)
    target = target.reshape(-1, dim).astype(jnp.float32)
    ind = ind.reshape(-1).astype(jnp.int32)
    B = output.shape[0]

    # NCHW -> (B, dim, W*H): spatial flattened last (lane-dense); keep dtype.
    feat = output.reshape(B, dim, width * height)

    if stride is None:
        stride = 288.0 / width

    if radius is None:
        return _fused_reg_loss(feat, ind[None], target[None],
                               jnp.ones((1,), jnp.int32), loss_type)

    # Build all (2r+1)^2 candidate offsets at once (vectorized, no host syncs).
    r = np.arange(-radius, radius + 1, dtype=np.float32)
    r_w = jnp.asarray(np.repeat(r, r.size))        # outer loop variable
    r_h = jnp.asarray(np.tile(r, r.size))          # inner loop variable

    center_w = (ind % width).astype(jnp.float32)   # (B,)
    center_h = (ind // width).astype(jnp.float32)

    t_wl = target[None, :, 0] + r_w[:, None] * stride      # (N_off, B)
    t_wr = target[None, :, 1] - r_w[:, None] * stride
    t_ht = target[None, :, 2] + r_h[:, None] * stride
    t_hb = target[None, :, 3] - r_h[:, None] * stride
    targets_off = jnp.stack((t_wl, t_wr, t_ht, t_hb), axis=2)   # (N_off, B, 4)

    ch = center_h[None, :] + r_h[:, None]                       # (N_off, B)
    cw = center_w[None, :] + r_w[:, None]
    inds_off = (ch * width + cw).astype(jnp.int32)              # (N_off, B)

    ok_t = jnp.all((t_wl >= 0.0) & (t_wr >= 0.0) & (t_ht >= 0.0) & (t_hb >= 0.0),
                   axis=1)
    # NOTE: both center bounds use `width`, mirroring the original PyTorch code.
    ok_c = jnp.all((ch >= 0.0) & (ch < width) & (cw >= 0.0) & (cw < width), axis=1)
    valid = (ok_t & ok_c).astype(jnp.int32)                     # (N_off,)

    # Append the unshifted (ind, target) as a fallback slot (only used when no
    # offset is valid — mirrors the `len(loss) == 0` branch of the reference).
    targets_all = jnp.concatenate([targets_off, target[None]], axis=0)
    inds_all = jnp.concatenate([inds_off, ind[None]], axis=0)
    valid_all = jnp.concatenate([valid, jnp.zeros((1,), jnp.int32)], axis=0)

    return _fused_reg_loss(feat, inds_all, targets_all, valid_all, loss_type)


# ----------------------------- pure reference -------------------------------
def _reference_reg_loss(output, ind, target, radius=None, stride=None, dim=4,
                        loss_type="iou"):
    """NumPy reference mirroring REGLoss.forward exactly (for testing only)."""
    output = np.asarray(output, np.float32)
    target = np.asarray(target, np.float32).reshape(-1, dim)
    ind = np.asarray(ind).reshape(-1).astype(np.int64)
    W, H = output.shape[-2], output.shape[-1]
    out = output.reshape(-1, dim, W, H)
    B = out.shape[0]
    feat = np.transpose(out, (0, 2, 3, 1)).reshape(B, W * H, dim)

    def gather(idx):
        return feat[np.arange(B), idx]

    def loss_fn(pred, tgt):
        if loss_type == "iou":
            p_l, p_r, p_t, p_b = pred[:, 0], pred[:, 1], pred[:, 2], pred[:, 3]
            t_l, t_r, t_t, t_b = tgt[:, 0], tgt[:, 1], tgt[:, 2], tgt[:, 3]
            t_area = (t_l + t_r) * (t_t + t_b)
            p_area = (p_l + p_r) * (p_t + p_b)
            w_i = np.minimum(p_l, t_l) + np.minimum(p_r, t_r)
            h_i = np.minimum(p_b, t_b) + np.minimum(p_t, t_t)
            a_i = w_i * h_i
            a_u = t_area + p_area - a_i
            return float(np.mean(-np.log((a_i + 1.0) / (a_u + 1.0))))
        return float(np.mean((pred - tgt) ** 2))

    if stride is None:
        stride = 288.0 / W
    if radius is None:
        return loss_fn(gather(ind), target)
    center_w = (ind % W).astype(np.float32)
    center_h = (ind // W).astype(np.float32)
    losses = []
    for r_w in range(-radius, radius + 1):
        for r_h in range(-radius, radius + 1):
            t_wl = target[:, 0] + r_w * stride
            t_wr = target[:, 1] - r_w * stride
            t_ht = target[:, 2] + r_h * stride
            t_hb = target[:, 3] - r_h * stride
            if (t_wl < 0).any() or (t_wr < 0).any() or (t_ht < 0).any() or (t_hb < 0).any():
                continue
            if ((center_h + r_h) < 0).any() or ((center_h + r_h) >= W).any() \
               or ((center_w + r_w) < 0).any() or ((center_w + r_w) >= W).any():
                continue
            tgt_c = np.stack((t_wl, t_wr, t_ht, t_hb), axis=1)
            ind_c = ((center_h + r_h) * W + (center_w + r_w)).astype(np.int64)
            losses.append(loss_fn(gather(ind_c), tgt_c))
    if len(losses) == 0:
        return loss_fn(gather(ind), target)
    return float(np.mean(losses))


if __name__ == "__main__":
    key = jax.random.PRNGKey(0)
    k1, k2 = jax.random.split(key)
    B, C, W, H = 2, 4, 16, 16

    # Positive regression maps / targets so the IOU log stays finite.
    output = jnp.abs(jax.random.normal(k1, (B, C, W, H), dtype=jnp.float32)) + 0.1
    target = jnp.array(
        np.asarray(jax.random.uniform(k2, (B, C), minval=40.0, maxval=60.0)),
        dtype=jnp.float32)
    # Second sample sits near the map border so some radius offsets get masked
    # (exercises the in-kernel validity mask).
    ind = jnp.array([[5 * W + 7], [0 * W + 15]], dtype=jnp.int32)   # (B, 1)

    reg_loss_jit = jax.jit(
        reg_loss, static_argnames=("radius", "stride", "dim", "loss_type"))

    checks = [
        dict(radius=None, loss_type="iou"),
        dict(radius=1, loss_type="iou"),
        dict(radius=None, loss_type="l2"),
    ]
    for cfg in checks:
        got = jax.block_until_ready(reg_loss_jit(output, ind, target, **cfg))
        want = _reference_reg_loss(output, ind, target, **cfg)
        if not np.allclose(np.asarray(got), want, rtol=1e-4, atol=1e-4):
            raise AssertionError(f"mismatch for {cfg}: pallas={float(got)} ref={want}")
        if not np.isfinite(float(got)):
            raise AssertionError(f"non-finite loss for {cfg}")

    print("KERNEL_OK")
</pallas_src>

<mosaic_0001>
module attributes {stable_mosaic.version = 11 : i64} {
  func.func @_fused_reg_loss_kernel(%arg0: i32, %arg1: memref<2xi32, #tpu.memory_space<smem>>, %arg2: memref<2xi32, #tpu.memory_space<smem>>, %arg3: memref<2x4x256xf32, #tpu.memory_space<vmem>>, %arg4: memref<1x2x4xf32, #tpu.memory_space<vmem>>, %arg5: memref<1x1xf32, #tpu.memory_space<vmem>>, %arg6: memref<1x1xf32, #tpu.memory_space<vmem>>) attributes {dimension_semantics = [#tpu.dimension_semantics<arbitrary>], iteration_bounds = array<i64: 1>, scalar_prefetch = 2 : i64, scratch_operands = 1 : i64, tpu.core_type = #tpu.core_type<tc>, window_params = [{pipeline_mode = #tpu.pipeline_mode<synchronous>, transform_indices = @transform_0, window_bounds = array<i64: 2, 4, 256>}, {transform_indices = @transform_1, window_bounds = array<i64: 1, 2, 4>}, {pipeline_mode = #tpu.pipeline_mode<synchronous>, transform_indices = @transform_2, window_bounds = array<i64: 1, 1>}]} {
    %c0_i32 = arith.constant 0 : i32
    %0 = arith.cmpi eq, %arg0, %c0_i32 : i32
    %1 = arith.extui %0 : i1 to i32
    %c0_i32_0 = arith.constant 0 : i32
    %2 = arith.cmpi ne, %1, %c0_i32_0 : i32
    scf.if %2 {
      %cst_24 = arith.constant 0.000000e+00 : f32
      %84 = vector.broadcast %cst_24 : f32 to vector<1x1xf32>
      %c0_25 = arith.constant 0 : index
      %c0_26 = arith.constant 0 : index
      %85 = vector.load %arg6[%c0_25, %c0_26] : memref<1x1xf32, #tpu.memory_space<vmem>>, vector<1x1xf32>
      tpu.vector_store %arg6[%c0_25, %c0_26], %84 {strides = array<i32>} : memref<1x1xf32, #tpu.memory_space<vmem>>, vector<1x1xf32>,
    } else {
    }
    %3 = tpu.iota {dimensions = array<i32: 1>} : vector<2x256xi32>
    %4 = tpu.iota {dimensions = array<i32: 0>} : vector<2x256xi32>
    %false = arith.constant false
    %5 = vector.broadcast %false : i1 to vector<2x256xi1>
    %c0_i32_1 = arith.constant 0 : i32
    %6 = vector.broadcast %c0_i32_1 : i32 to vector<2x256xi32>
    %7 = arith.cmpi eq, %4, %6 : vector<2x256xi32>
    %c2_i32 = arith.constant 2 : i32
    %8 = arith.muli %arg0, %c2_i32 : i32
    %c0_i32_2 = arith.constant 0 : i32
    %9 = arith.addi %8, %c0_i32_2 : i32
    %10 = arith.index_cast %9 : i32 to index
    %11 = memref.load %arg1[%10] : memref<2xi32, #tpu.memory_space<smem>>
    %12 = vector.broadcast %11 : i32 to vector<2x256xi32>
    %13 = arith.cmpi eq, %3, %12 : vector<2x256xi32>
    %14 = arith.andi %7, %13 : vector<2x256xi1>
    %15 = arith.ori %5, %14 : vector<2x256xi1>
    %c1_i32 = arith.constant 1 : i32
    %16 = vector.broadcast %c1_i32 : i32 to vector<2x256xi32>
    %17 = arith.cmpi eq, %4, %16 : vector<2x256xi32>
    %c2_i32_3 = arith.constant 2 : i32
    %18 = arith.muli %arg0, %c2_i32_3 : i32
    %c1_i32_4 = arith.constant 1 : i32
    %19 = arith.addi %18, %c1_i32_4 : i32
    %20 = arith.index_cast %19 : i32 to index
    %21 = memref.load %arg1[%20] : memref<2xi32, #tpu.memory_space<smem>>
    %22 = vector.broadcast %21 : i32 to vector<2x256xi32>
    %23 = arith.cmpi eq, %3, %22 : vector<2x256xi32>
    %24 = arith.andi %17, %23 : vector<2x256xi1>
    %25 = arith.ori %15, %24 : vector<2x256xi1>
    %c0 = arith.constant 0 : index
    %c0_5 = arith.constant 0 : index
    %c0_6 = arith.constant 0 : index
    %26 = vector.load %arg3[%c0, %c0_5, %c0_6] : memref<2x4x256xf32, #tpu.memory_space<vmem>>, vector<2x4x256xf32>
    %27 = vector.shape_cast %25 : vector<2x256xi1> to vector<2x1x256xi1>
    %cst = arith.constant 0.000000e+00 : f32
    %28 = vector.shape_cast %27 : vector<2x1x256xi1> to vector<2x1x256xi1>
    %29 = vector.broadcast %28 : vector<2x1x256xi1> to vector<2x4x256xi1>
    %30 = vector.broadcast %cst : f32 to vector<2x4x256xf32>
    %31 = arith.select %29, %26, %30 : vector<2x4x256xi1>, vector<2x4x256xf32>
    %cst_7 = arith.constant dense<0.000000e+00> : vector<2x4xf32>
    %32 = vector.multi_reduction <add>, %31, %cst_7 [2] : vector<2x4x256xf32> to vector<2x4xf32>
    %c0_8 = arith.constant 0 : index
    %c0_9 = arith.constant 0 : index
    %c0_10 = arith.constant 0 : index
    %33 = vector.load %arg4[%c0_8, %c0_9, %c0_10] : memref<1x2x4xf32, #tpu.memory_space<vmem>>, vector<1x2x4xf32>
    %34 = vector.shape_cast %33 : vector<1x2x4xf32> to vector<2x4xf32>
    %35 = vector.extract_strided_slice %32 {offsets = [0, 0], sizes = [2, 1], strides = [1, 1]} : vector<2x4xf32> to vector<2x1xf32>
    %36 = vector.extract_strided_slice %32 {offsets = [0, 1], sizes = [2, 1], strides = [1, 1]} : vector<2x4xf32> to vector<2x1xf32>
    %37 = vector.extract_strided_slice %32 {offsets = [0, 2], sizes = [2, 1], strides = [1, 1]} : vector<2x4xf32> to vector<2x1xf32>
    %38 = vector.extract_strided_slice %32 {offsets = [0, 3], sizes = [2, 1], strides = [1, 1]} : vector<2x4xf32> to vector<2x1xf32>
    %39 = vector.extract_strided_slice %34 {offsets = [0, 0], sizes = [2, 1], strides = [1, 1]} : vector<2x4xf32> to vector<2x1xf32>
    %40 = vector.extract_strided_slice %34 {offsets = [0, 1], sizes = [2, 1], strides = [1, 1]} : vector<2x4xf32> to vector<2x1xf32>
    %41 = vector.extract_strided_slice %34 {offsets = [0, 2], sizes = [2, 1], strides = [1, 1]} : vector<2x4xf32> to vector<2x1xf32>
    %42 = vector.extract_strided_slice %34 {offsets = [0, 3], sizes = [2, 1], strides = [1, 1]} : vector<2x4xf32> to vector<2x1xf32>
    %43 = arith.addf %39, %40 : vector<2x1xf32>
    %44 = arith.addf %41, %42 : vector<2x1xf32>
    %45 = arith.mulf %43, %44 : vector<2x1xf32>
    %46 = arith.addf %35, %36 : vector<2x1xf32>
    %47 = arith.addf %37, %38 : vector<2x1xf32>
    %48 = arith.mulf %46, %47 : vector<2x1xf32>
    %49 = arith.minimumf %35, %39 : vector<2x1xf32>
    %50 = arith.minimumf %36, %40 : vector<2x1xf32>
    %51 = arith.addf %49, %50 : vector<2x1xf32>
    %52 = arith.minimumf %38, %42 : vector<2x1xf32>
    %53 = arith.minimumf %37, %41 : vector<2x1xf32>
    %54 = arith.addf %52, %53 : vector<2x1xf32>
    %55 = arith.mulf %51, %54 : vector<2x1xf32>
    %56 = arith.addf %45, %48 : vector<2x1xf32>
    %57 = arith.subf %56, %55 : vector<2x1xf32>
    %cst_11 = arith.constant 1.000000e+00 : f32
    %58 = vector.broadcast %cst_11 : f32 to vector<2x1xf32>
    %59 = arith.addf %55, %58 : vector<2x1xf32>
    %cst_12 = arith.constant 1.000000e+00 : f32
    %60 = vector.broadcast %cst_12 : f32 to vector<2x1xf32>
    %61 = arith.addf %57, %60 : vector<2x1xf32>
    %62 = arith.divf %59, %61 : vector<2x1xf32>
    %63 = math.log %62 : vector<2x1xf32>
    %cst_13 = arith.constant 0.000000e+00 : f32
    %64 = vector.broadcast %cst_13 : f32 to vector<2x1xf32>
    %65 = arith.subf %64, %63 : vector<2x1xf32>
    %66 = vector.shape_cast %65 : vector<2x1xf32> to vector<1x2x1xf32>
    %cst_14 = arith.constant dense<0.000000e+00> : vector<1xf32>
    %67 = vector.multi_reduction <add>, %66, %cst_14 [1, 2] : vector<1x2x1xf32> to vector<1xf32>
    %68 = vector.shape_cast %67 : vector<1xf32> to vector<1x1x1xf32>
    %69 = vector.extract %68[0, 0, 0] : f32 from vector<1x1x1xf32>
    %70 = vector.broadcast %69 : f32 to vector<1x1xf32>
    %cst_15 = arith.constant 2.000000e+00 : f32
    %71 = vector.broadcast %cst_15 : f32 to vector<1x1xf32>
    %72 = arith.divf %70, %71 : vector<1x1xf32>
    %73 = arith.index_cast %arg0 : i32 to index
    %74 = memref.load %arg2[%73] : memref<2xi32, #tpu.memory_space<smem>>
    %c0_i32_16 = arith.constant 0 : i32
    %75 = arith.cmpi sgt, %74, %c0_i32_16 : i32
    %cst_17 = arith.constant 0.000000e+00 : f32
    %76 = vector.broadcast %cst_17 : f32 to vector<1x1xf32>
    %77 = arith.select %75, %72, %76 : vector<1x1xf32>
    %c0_18 = arith.constant 0 : index
    %c0_19 = arith.constant 0 : index
    %78 = vector.load %arg6[%c0_18, %c0_19] : memref<1x1xf32, #tpu.memory_space<vmem>>, vector<1x1xf32>
    %79 = arith.addf %78, %77 : vector<1x1xf32>
    %c0_20 = arith.constant 0 : index
    %c0_21 = arith.constant 0 : index
    %80 = vector.load %arg6[%c0_20, %c0_21] : memref<1x1xf32, #tpu.memory_space<vmem>>, vector<1x1xf32>
    tpu.vector_store %arg6[%c0_20, %c0_21], %79 {strides = array<i32>} : memref<1x1xf32, #tpu.memory_space<vmem>>, vector<1x1xf32>,
    %c0_i32_22 = arith.constant 0 : i32
    %81 = arith.cmpi eq, %arg0, %c0_i32_22 : i32
    %82 = arith.extui %81 : i1 to i32
    %c0_i32_23 = arith.constant 0 : i32
    %83 = arith.cmpi ne, %82, %c0_i32_23 : i32
    scf.if %83 {
      %c1 = arith.constant 1 : index
      %84 = memref.load %arg2[%c1] : memref<2xi32, #tpu.memory_space<smem>>
      %85 = arith.sitofp %84 : i32 to f32
      %cst_24 = arith.constant 1.000000e+00 : f32
      %86 = arith.maximumf %85, %cst_24 : f32
      %87 = vector.broadcast %86 : f32 to vector<1x1xf32>
      %88 = arith.divf %79, %87 : vector<1x1xf32>
      %c0_i32_25 = arith.constant 0 : i32
      %89 = arith.cmpi sgt, %84, %c0_i32_25 : i32
      %90 = arith.select %89, %88, %72 : vector<1x1xf32>
      %c0_26 = arith.constant 0 : index
      %c0_27 = arith.constant 0 : index
      %91 = vector.load %arg5[%c0_26, %c0_27] : memref<1x1xf32, #tpu.memory_space<vmem>>, vector<1x1xf32>
      tpu.vector_store %arg5[%c0_26, %c0_27], %90 {strides = array<i32>} : memref<1x1xf32, #tpu.memory_space<vmem>>, vector<1x1xf32>,
    } else {
    }
    return
  }
  func.func @transform_0(%arg0: i32, %arg1: memref<2xi32, #tpu.memory_space<smem>>, %arg2: memref<2xi32, #tpu.memory_space<smem>>) -> (i32, i32, i32) {
    %c0_i32 = arith.constant 0 : i32
    %c0_i32_0 = arith.constant 0 : i32
    %c0_i32_1 = arith.constant 0 : i32
    %c0_i32_2 = arith.constant 0 : i32
    return %c0_i32, %c0_i32_0, %c0_i32_1 : i32, i32, i32
  }
  func.func @transform_1(%arg0: i32, %arg1: memref<2xi32, #tpu.memory_space<smem>>, %arg2: memref<2xi32, #tpu.memory_space<smem>>) -> (i32, i32, i32) {
    %c0_i32 = arith.constant 0 : i32
    %c0_i32_0 = arith.constant 0 : i32
    %c0_i32_1 = arith.constant 0 : i32
    return %arg0, %c0_i32, %c0_i32_0 : i32, i32, i32
  }
  func.func @transform_2(%arg0: i32, %arg1: memref<2xi32, #tpu.memory_space<smem>>, %arg2: memref<2xi32, #tpu.memory_space<smem>>) -> (i32, i32) {
    %c0_i32 = arith.constant 0 : i32
    %c0_i32_0 = arith.constant 0 : i32
    %c0_i32_1 = arith.constant 0 : i32
    return %c0_i32, %c0_i32_0 : i32, i32
  }
}

</mosaic_0001>

<llo_original>
// kernel: reg_loss.1
$region0: #{reg_loss.1}
  #allocation0 [shape = 'u32[]', space=smem, size = 0x4, offset = 0x4, fixed_abs, tag = 'smem constant byte address 0x4 - core index']
  #allocation1 [shape = 'u32[144,128]{1,0:T(1,128)}', space=vmem, size = 0x12000, scoped, tag = 'internal scratch']
  #allocation2 [shape = 'f32[1,1]{1,0:T(1,128)}', space=vmem, size = 0x200, scoped, tag = 'scratch operand']
  #allocation3 [shape = 's32[1]{0}', space=sflag, size = 0x4, scoped, tag = 'scoped memory for reg_loss.1']
  #allocation4 [shape = 'u8[512]{0}', space=smem, size = 0x200, scoped, tag = 'prefetched SMEM operand 0']
  #allocation5 [shape = 'u8[512]{0}', space=smem, size = 0x200, scoped, tag = 'prefetched SMEM operand 1']
  %s0 = inlined_call_operand.vmem [shape: s32[2], index: 0, kind: input, shape index: {}]
  %s1 = inlined_call_operand.vmem [shape: s32[2], index: 1, kind: input, shape index: {}]
  %s2 = inlined_call_operand.vmem [shape: f32[2,4,256], index: 2, kind: input, shape index: {}]
  %s3 = inlined_call_operand.vmem [shape: f32[1,2,4], index: 3, kind: input, shape index: {}]
  %s4 = inlined_call_operand.hbm [shape: f32[1,1], index: 4, kind: output, shape index: {}]
  %s5 = sld [smem:[#allocation0]]
  $region26: #{reg_loss.1} parent=0
    _
  %s7 = ssub.s32 1, %s5
  %s8 = scalar_select 0, %s7, %s5
  %s9 = sshll.u32 %s0, 4
  %s10 = int_to_ptr.vmem [resolvable:$true] %s9
  %12 = dma.vmem_to_smem %s10, 16, [#allocation4], [#allocation3]
  %s13 = sshll.u32 %s1, 4
  %s14 = int_to_ptr.vmem [resolvable:$true] %s13
  %16 = dma.vmem_to_smem %s14, 16, [#allocation5], [#allocation3]
  %17 = dma.done [#allocation3], 32
  %18 = sfence
  $region1: #{reg_loss.1} parent=0
    #allocation6 [shape = 'u8[512]{0}', space=vmem, size = 0x400, scoped, tag = 'output window, operand 0, single buffered']
    #allocation7 [shape = 's32[1]{0}', space=sflag, size = 0x4, scoped, tag = 'scoped memory for reg_loss.1']
    %19 = vsyncpa [#allocation7], 0
    // Predicated region
    $region2: #{reg_loss.1} parent=1 // pred_check
      _
    $region3: #{reg_loss.1} parent=1 // pred_check_branch
      %21 = sbr.rel (0) target = $region5
    $region4: #{reg_loss.1} parent=1 // pred_region
      _
    $region5: #{reg_loss.1} parent=1 // pred_fallthru
      _
    // Predicated region
    $region6: #{reg_loss.1} parent=1 // pred_check
      _
    $region7: #{reg_loss.1} parent=1 // pred_check_branch
      %23 = sbr.rel (0) target = $region9
    $region8: #{reg_loss.1} parent=1 // pred_region
      _
    $region9: #{reg_loss.1} parent=1 // pred_fallthru
      _
    %p24 = scmp.eq.s32.totalorder 0, 0
    // Predicated region
    $region10: #{reg_loss.1} parent=1 // pred_check
      %p25 = pneg %p24
    $region11: #{reg_loss.1} parent=1 // pred_check_branch
      %27 = sbr.rel (%p25) target = $region13
    $region12: #{reg_loss.1} parent=1 // pred_region
      %vm28 = vcmask 0
      %29 = vst.msk [vmem:[#allocation2] sm:$0x1] %vm28, 0.0
    $region13: #{reg_loss.1} parent=1 // pred_fallthru
      _
    %v30 = vlaneseq
    %v31 = vand.u32 %v30, 127
    %v32 = vadd.s32 %v31, 128
    %v33 = vlaneseq
    %v34 = vshrl.u32 %v33, 7
    %vm35 = vcmp.eq.s32.totalorder %v34, 0
    %s36 = smul.u32 0, 2
    %s37 = sld [smem:[#allocation4 + %s36]]
    %v38 = vstv %s37
    %vm39 = vcmp.eq.s32.totalorder %v31, %v38
    %vm40 = vcmp.eq.s32.totalorder %v32, %v38
    %vm41 = vmand %vm35, %vm39
    %vm42 = vmand %vm35, %vm40
    %vm43 = vcmp.eq.s32.totalorder %v34, 1
    %s44 = sadd.s32 %s36, 1
    %s45 = sld [smem:[#allocation4 + %s44]]
    %v46 = vstv %s45
    %vm47 = vcmp.eq.s32.totalorder %v31, %v46
    %vm48 = vcmp.eq.s32.totalorder %v32, %v46
    %vm49 = vmand %vm43, %vm47
    %vm50 = vmand %vm43, %vm48
    %vm51 = vmor %vm41, %vm49
    %vm52 = vmor %vm42, %vm50
    %v53 = vld [vmem:[%s2] sm:$0xff]
    %v54 = vld [vmem:[%s2 + $0x8] sm:$0xff]
    %v55 = vsel %vm51, 1, 0
    %v56 = vsel %vm52, 1, 0
    %v57 = vcombine.low %v55, %v56
    %v59 = vunpack.c.l.s4 1966171168
    %v60 = vunpack.c.0.s8 %v59
    %v61 = vlaneseq
    %v62 = vshrl.u32 %v61, 7
    %v63 = vsub.s32 %v60, %v62
    %v64 = vrot.slane %v57, %v63
    %v65 = vcombine.high %v64, %v64
    %v67 = vunpack.c.l.s4 1966171168
    %v68 = vunpack.c.0.s8 %v67
    %v69 = vlaneseq
    %v70 = vshrl.u32 %v69, 7
    %v71 = vsub.s32 %v68, %v70
    %v72 = vrot.slane %v64, %v71
    %v74 = vunpack.c.l.s4 1966171168
    %v75 = vunpack.c.0.s8 %v74
    %v76 = vlaneseq
    %v77 = vshrl.u32 %v76, 7
    %v78 = vsub.s32 %v75, %v77
    %v79 = vrot.slane %v65, %v78
    %vm80 = vcmp.ne.s32.totalorder %v72, 0
    %vm81 = vcmp.ne.s32.totalorder %v79, 0
    %v82 = vsel %vm80, 1, 0
    %v83 = vsel %vm81, 1, 0
    %v84 = vlaneseq
    %v85 = vshrl.u32 %v84, 7
    %v86 = vsub.s32 0, %v85
    %v87 = vrot.slane %v82, %v86
    %v88 = vlaneseq
    %v89 = vshrl.u32 %v88, 7
    %v90 = vsub.s32 1, %v89
    %v91 = vrot.slane %v82, %v90
    %v92 = vlaneseq
    %v93 = vshrl.u32 %v92, 7
    %v94 = vsub.s32 0, %v93
    %v95 = vrot.slane %v83, %v94
    %v96 = vlaneseq
    %v97 = vshrl.u32 %v96, 7
    %v98 = vsub.s32 1, %v97
    %v99 = vrot.slane %v83, %v98
    %vm100 = vcmp.eq.s32.totalorder %v87, 1
    %vm101 = vcmp.eq.s32.totalorder %v91, 1
    %vm102 = vcmp.eq.s32.totalorder %v95, 1
    %vm103 = vcmp.eq.s32.totalorder %v99, 1
    %v106 = vcombine.high %v53, %v53
    %v107 = vcombine.high %v54, %v54
    %v110 = vsel %vm100, %v53, 0.0
    %v111 = vsel %vm101, %v106, 0.0
    %v112 = vsel %vm102, %v54, 0.0
    %v113 = vsel %vm103, %v107, 0.0
    %vm114 = vcmask 1043456
    %v115 = vsel %vm114, %v110, 0.0
    %v116 = vsel %vm114, %v111, 0.0
    %v117 = vadd.f32 %v115, %v116
    %118 = vadd.xlane.f32.xlu0 %v117
    %v119 = vpop.xlane.xlu0 %118
    %v120 = vsel %vm114, %v112, 0.0
    %v121 = vsel %vm114, %v113, 0.0
    %v122 = vadd.f32 %v120, %v121
    %123 = vadd.xlane.f32.xlu0 %v122
    %v124 = vpop.xlane.xlu0 %123
    %v125 = vld [vmem:[%s3] sm:$0x3]
    %127 = vrot.lane.b32.xlu0 %v125, 127
    %v128 = vpop.permute.xlu0 %127
    %v130 = vadd.f32 %v125, %v128
    %132 = vrot.lane.b32.xlu0 %v130, 126
    %v133 = vpop.permute.xlu0 %132
    %v135 = vmul.f32 %v130, %v133
    %v138 = vrot.slane %v119, 1
    %v139 = vrot.slane %v124, 1
    %v142 = vadd.f32 %v119, %v138
    %v143 = vadd.f32 %v124, %v139
    %v146 = vrot.slane %v142, 2
    %v147 = vrot.slane %v143, 2
    %v150 = vmul.f32 %v142, %v146
    %v151 = vmul.f32 %v143, %v147
    %v152 = vlaneseq
    %v153 = vshrl.u32 %v152, 7
    %v154 = vsub.s32 0, %v153
    %v155 = vrot.slane %v125, %v154
    %157 = vbcast.lane.b32.xlu0 %v155, 256
    %v158 = vpop.permute.xlu0 %157
    %v159 = vlaneseq
    %v160 = vshrl.u32 %v159, 7
    %v161 = vsub.s32 1, %v160
    %v162 = vrot.slane %v125, %v161
    %164 = vbcast.lane.b32.xlu0 %v162, 256
    %v165 = vpop.permute.xlu0 %164
    %v168 = vmin.f32 %v119, %v158
    %v169 = vmin.f32 %v124, %v165
    %v172 = vrot.slane %v168, 1
    %v173 = vrot.slane %v169, 1
    %v176 = vadd.f32 %v168, %v172
    %v177 = vadd.f32 %v169, %v173
    %v178 = vrot.slane %v168, 7
    %v179 = vrot.slane %v169, 7
    %v182 = vadd.f32 %v168, %v178
    %v183 = vadd.f32 %v169, %v179
    %v186 = vrot.slane %v182, 3
    %v187 = vrot.slane %v183, 3
    %v190 = vmul.f32 %v176, %v186
    %v191 = vmul.f32 %v177, %v187
    %v194 = vrot.slane %v151, 7
    %vm195 = vcmask 1041409
    %v196 = vsel %vm195, %v194, %v150
    %v198 = vadd.f32 %v135, %v196
    %v201 = vrot.slane %v191, 7
    %v202 = vsel %vm195, %v201, %v190
    %v204 = vsub.f32 %v198, %v202
    %v205 = vadd.f32 %v190, 1.0
    %v206 = vadd.f32 %v191, 1.0
    %v207 = vadd.f32 %v204, 1.0
    %v209 = vlaneseq
    %v210 = vshrl.u32 %v209, 7
    %v211 = vsub.s32 0, %v210
    %v212 = vrot.slane %v207, %v211
    %214 = vbcast.lane.b32.xlu0 %v212, 256
    %v215 = vpop.permute.xlu0 %214
    %v216 = vlaneseq
    %v217 = vshrl.u32 %v216, 7
    %v218 = vsub.s32 1, %v217
    %v219 = vrot.slane %v207, %v218
    %221 = vbcast.lane.b32.xlu0 %v219, 256
    %v222 = vpop.permute.xlu0 %221
    %v225 = vrcp.pop %v215
    %v226 = vmul.f32 %v205, %v225
    %v227 = vrcp.pop %v222
    %v228 = vmul.f32 %v206, %v227
    %v229 = vlog2.pop %v226
    %v230 = vmul.f32 %v229, 0.6931472
    %v231 = vlog2.pop %v228
    %v232 = vmul.f32 %v231, 0.6931472
    %v233 = vsub.f32 0.0, %v230
    %v234 = vsub.f32 0.0, %v232
    %v237 = vrot.slane %v234, 7
    %v238 = vsel %vm195, %v237, %v233
    %vm240 = vcmask 1024
    %v241 = vsel %vm240, %v238, 0.0
    %242 = vadd.xlane.f32.xlu0 %v241
    %v243 = vpop.xlane.xlu0 %242
    %v244 = vrot.slane %v243, 4
    %v245 = vadd.f32 %v243, %v244
    %v246 = vrot.slane %v245, 2
    %v247 = vadd.f32 %v245, %v246
    %v248 = vrot.slane %v247, 1
    %v249 = vadd.f32 %v247, %v248
    %s250 = vtos %v249
    %v251 = vstv %s250
    %v252 = vrcp.pop 2.0
    %v253 = vmul.f32 %v251, %v252
    %s254 = sld [smem:[#allocation5]]
    %p255 = scmp.gt.s32.totalorder %s254, 0
    %s256 = scalar_select %p255, 1, 0
    %v257 = vstv %s256
    %vm258 = vcmp.eq.s32.totalorder %v257, 1
    %v259 = vsel %vm258, %v253, 0.0
    %v260 = vld [vmem:[#allocation2] sm:$0x1]
    %v261 = vadd.f32 %v260, %v259
    %vm262 = vcmask 0
    %263 = vst.msk [vmem:[#allocation2] sm:$0x1] %vm262, %v261
    // Predicated region
    $region14: #{reg_loss.1} parent=1 // pred_check
      %p264 = pneg %p24
    $region15: #{reg_loss.1} parent=1 // pred_check_branch
      %266 = sbr.rel (%p264) target = $region17
    $region16: #{reg_loss.1} parent=1 // pred_region
      %s267 = sld [smem:[#allocation5 + $0x1]]
      %s268 = scvt.s32.f32 %s267
      %s269 = smax.f32 %s268, 1.0
      %v270 = vstv %s269
      %v271 = vrcp.pop %v270
      %v272 = vmul.f32 %v261, %v271
      %p273 = scmp.gt.s32.totalorder %s267, 0
      %s274 = scalar_select %p273, 1, 0
      %v275 = vstv %s274
      %vm276 = vcmp.eq.s32.totalorder %v275, 1
      %v277 = vsel %vm276, %v272, %v253
      %278 = vst.msk [vmem:[#allocation6] sm:$0x1] %vm262, %v277
    $region17: #{reg_loss.1} parent=1 // pred_fallthru
      _
    // Predicated region
    $region18: #{reg_loss.1} parent=1 // pred_check
      _
    $region19: #{reg_loss.1} parent=1 // pred_check_branch
      %280 = sbr.rel (0) target = $region21
    $region20: #{reg_loss.1} parent=1 // pred_region
      %s282 = ssub.s32 16, 16
      %283 = vsyncadd [#allocation7], %s282
      %s285 = sshll.u32 [#allocation6], 4
      %s286 = int_to_ptr.vmem [resolvable:$true] %s285
      %288 = dma.vmem_to_hbm [thread:$0]  %s286, 16, %s4, [#allocation7]
    $region21: #{reg_loss.1} parent=1 // pred_fallthru
      _
    // Predicated region
    $region22: #{reg_loss.1} parent=1 // pred_check
      _
    $region23: #{reg_loss.1} parent=1 // pred_check_branch
      %290 = sbr.rel (0) target = $region25
    $region24: #{reg_loss.1} parent=1 // pred_region
      %291 = dma.done [#allocation7], 16
    $region25: #{reg_loss.1} parent=1 // pred_fallthru
      _
    %292 = vsyncpa [#allocation7], 1

</llo_original>
